<compile_context>
chip_gen: v6e
topology: v6e:2x2x1
jax: 0.10.0
libtpu: 0.0.40
codegen_flags: <defaults>
</compile_context>

<pallas_src>
import jax
import jax.numpy as jnp
from jax.experimental import pallas as pl
from jax.experimental.pallas import tpu as pltpu


def _round_up(x, m):
    return ((x + m - 1) // m) * m


# ----------------------------- Pallas kernels -----------------------------

def _linear_whole_kernel(x_ref, w_ref, b_ref, o_ref):
    # x: (B, H_in), w: (H_in, H_out), b: (1, H_out) -> o: (B, H_out)
    acc = jnp.dot(x_ref[...], w_ref[...], preferred_element_type=jnp.float32)
    o_ref[...] = (acc + b_ref[...].astype(jnp.float32)).astype(o_ref.dtype)


def _linear_tiled_kernel(x_ref, w_ref, b_ref, o_ref, acc_ref):
    k = pl.program_id(2)

    # Bias folded into the accumulator init: no separate zero-fill, and the
    # finalize path (not hidden by the pipeline) is just a cast + store.
    @pl.when(k == 0)
    def _():
        acc_ref[...] = jnp.broadcast_to(
            b_ref[...].astype(jnp.float32), acc_ref.shape)

    acc_ref[...] += jnp.dot(x_ref[...], w_ref[...],
                            preferred_element_type=jnp.float32)

    @pl.when(k == pl.num_programs(2) - 1)
    def _():
        o_ref[...] = acc_ref[...].astype(o_ref.dtype)


# ------------------------------ JAX wrappers -------------------------------

# Everything-in-one-block threshold for the un-tiled path (x + w + b + out).
# Kept well under every generation's scoped-VMEM default (16/32 MiB).
_SMALL_PATH_BYTES = 4 * 1024 * 1024


def linear_pallas(x, w, b, *, tm=256, tn=256, tk=512, compute_dtype=None):
    """x @ w + b on the MXU.

    Tiny problems (total operand bytes <= ~4 MiB) take a single-block
    whole-array path: one DMA per operand, no grid/pipeline bookkeeping.
    Larger problems take the tiled path: 256x256 output tiles, K streamed in
    512-chunks with an f32 VMEM accumulator, K marked "arbitrary" and M/N
    "parallel" (v7x's two TensorCores split the M/N grid).  Shapes that are
    not tile-divisible are zero-padded to tile multiples and the result is
    sliced back (zero padding along K contributes exactly 0).
    """
    out_dtype = x.dtype
    B, Hin = x.shape
    Hout = w.shape[1]

    if compute_dtype is not None:
        # Optional bf16 MXU inputs; accumulation stays f32 inside the kernel.
        x = x.astype(compute_dtype)
        w = w.astype(compute_dtype)

    itemsize = jnp.dtype(x.dtype).itemsize
    total_bytes = (B * Hin + Hin * Hout + Hout + B * Hout) * itemsize

    if total_bytes <= _SMALL_PATH_BYTES:
        # Small-shape path: one block per operand, no grid, no pipeline overhead.
        return pl.pallas_call(
            _linear_whole_kernel,
            out_shape=jax.ShapeDtypeStruct((B, Hout), out_dtype),
            in_specs=[
                pl.BlockSpec((B, Hin), lambda: (0, 0)),
                pl.BlockSpec((Hin, Hout), lambda: (0, 0)),
                pl.BlockSpec((1, Hout), lambda: (0, 0)),
            ],
            out_specs=pl.BlockSpec((B, Hout), lambda: (0, 0)),
        )(x, w, b)

    # ---- Tiled path ----
    # Clamp tiles to the hardware-aligned problem size: tm multiple of 8
    # (sublanes), tn/tk multiples of 128 (lanes).  Keeping tm <= padded-B and
    # tn at 256 preserves >=2 parallel blocks for megacore when B is small.
    tm = min(tm, _round_up(B, 8))
    tn = min(tn, _round_up(Hout, 128))
    tk = min(tk, _round_up(Hin, 128))

    B_p = _round_up(B, tm)
    Hin_p = _round_up(Hin, tk)
    Hout_p = _round_up(Hout, tn)

    if (B_p, Hin_p) != (B, Hin):
        x = jnp.pad(x, ((0, B_p - B), (0, Hin_p - Hin)))
    if (Hin_p, Hout_p) != (Hin, Hout):
        w = jnp.pad(w, ((0, Hin_p - Hin), (0, Hout_p - Hout)))
    if Hout_p != Hout:
        b = jnp.pad(b, ((0, 0), (0, Hout_p - Hout)))

    # TODO(synk): add pipeline_mode=pl.Buffered(3) on the x/w specs only if
    # profiling shows exposed DMA at these tile sizes (most likely on v5e).
    out = pl.pallas_call(
        _linear_tiled_kernel,
        out_shape=jax.ShapeDtypeStruct((B_p, Hout_p), out_dtype),
        grid_spec=pltpu.PrefetchScalarGridSpec(
            num_scalar_prefetch=0,
            grid=(B_p // tm, Hout_p // tn, Hin_p // tk),
            in_specs=[
                pl.BlockSpec((tm, tk), lambda i, j, k: (i, k)),
                pl.BlockSpec((tk, tn), lambda i, j, k: (k, j)),
                pl.BlockSpec((1, tn), lambda i, j, k: (0, j)),
            ],
            out_specs=pl.BlockSpec((tm, tn), lambda i, j, k: (i, j)),
            scratch_shapes=[pltpu.VMEM((tm, tn), jnp.float32)],
        ),
        compiler_params=pltpu.CompilerParams(
            dimension_semantics=("parallel", "parallel", "arbitrary")),
    )(x, w, b)

    if (B_p, Hout_p) != (B, Hout):
        out = out[:B, :Hout]
    return out


def submodel_forward(x2, x4, w, b):
    """Mirrors SubModel.forward: computes x3 = layer3(x2) as a side value and
    returns x4 unchanged (no copy kernel — identity needs no data movement)."""
    x3 = linear_pallas(x2, w, b)   # the only real work: Linear on the MXU
    return x4, x3                  # "return x4" — passed through directly


# --------------------------------- main ------------------------------------

if __name__ == "__main__":
    key = jax.random.PRNGKey(0)
    k1, k2, k3, k4, k5, k6, k7 = jax.random.split(key, 7)

    # --- Small, module-consistent shapes (launch-latency bound; whole path) ---
    B, H_IN, H_OUT = 8, 128, 128
    X4_SHAPE = (8, 128)

    x2 = jax.random.normal(k1, (B, H_IN), dtype=jnp.float32)
    x4 = jax.random.normal(k2, X4_SHAPE, dtype=jnp.float32)
    # layer3 = nn.Linear(H_IN, H_OUT), stored transposed (H_IN, H_OUT) vs
    # PyTorch's (out, in) layout.
    w = (jax.random.normal(k3, (H_IN, H_OUT), dtype=jnp.float32)
         * (1.0 / jnp.sqrt(H_IN)))
    b = jax.random.normal(k4, (1, H_OUT), dtype=jnp.float32) * 0.01

    out, x3 = submodel_forward(x2, x4, w, b)
    jax.block_until_ready((out, x3))

    assert out.shape == x4.shape
    assert jnp.allclose(out, x4)                      # module output is exactly x4
    ref_x3 = x2 @ w + b
    assert jnp.allclose(x3, ref_x3, atol=1e-5, rtol=1e-5)

    # --- Exercise the tiled + padded path (non-tile-divisible, > 4 MiB) ------
    Bt, Hit, Hot = 200, 1000, 900
    x2t = jax.random.normal(k5, (Bt, Hit), dtype=jnp.float32)
    wt = (jax.random.normal(k6, (Hit, Hot), dtype=jnp.float32)
          * (1.0 / jnp.sqrt(Hit)))
    bt = jax.random.normal(k7, (1, Hot), dtype=jnp.float32) * 0.01

    x3t = linear_pallas(x2t, wt, bt)
    jax.block_until_ready(x3t)
    ref_t = x2t @ wt + bt
    assert x3t.shape == ref_t.shape
    assert jnp.allclose(x3t, ref_t, atol=1e-4, rtol=1e-4)

    print("KERNEL_OK")
</pallas_src>

<mosaic_0001>
module attributes {stable_mosaic.version = 11 : i64} {
  func.func @_linear_whole_kernel(%arg0: memref<8x128xf32, #tpu.memory_space<vmem>>, %arg1: memref<128x128xf32, #tpu.memory_space<vmem>>, %arg2: memref<1x128xf32, #tpu.memory_space<vmem>>, %arg3: memref<8x128xf32, #tpu.memory_space<vmem>>) attributes {dimension_semantics = [], scalar_prefetch = 0 : i64, scratch_operands = 0 : i64, tpu.core_type = #tpu.core_type<tc>} {
    %c0 = arith.constant 0 : index
    %c0_0 = arith.constant 0 : index
    %0 = vector.load %arg0[%c0, %c0_0] : memref<8x128xf32, #tpu.memory_space<vmem>>, vector<8x128xf32>
    %c0_1 = arith.constant 0 : index
    %c0_2 = arith.constant 0 : index
    %1 = vector.load %arg1[%c0_1, %c0_2] : memref<128x128xf32, #tpu.memory_space<vmem>>, vector<128x128xf32>
    %cst = arith.constant dense<0.000000e+00> : vector<8x128xf32>
    %2 = tpu.matmul %0, %1, %cst {dimension_numbers = #tpu.dot_dimension_numbers<[1], [0], [0], [1], [0, 0, 1, 1], [], []>} : vector<8x128xf32>, vector<128x128xf32>, vector<8x128xf32> -> vector<8x128xf32>
    %c0_3 = arith.constant 0 : index
    %c0_4 = arith.constant 0 : index
    %3 = vector.load %arg2[%c0_3, %c0_4] : memref<1x128xf32, #tpu.memory_space<vmem>>, vector<1x128xf32>
    %4 = vector.broadcast %3 : vector<1x128xf32> to vector<8x128xf32>
    %5 = arith.addf %2, %4 : vector<8x128xf32>
    %c0_5 = arith.constant 0 : index
    %c0_6 = arith.constant 0 : index
    %6 = vector.load %arg3[%c0_5, %c0_6] : memref<8x128xf32, #tpu.memory_space<vmem>>, vector<8x128xf32>
    tpu.vector_store %arg3[%c0_5, %c0_6], %5 {strides = array<i32>} : memref<8x128xf32, #tpu.memory_space<vmem>>, vector<8x128xf32>,
    return
  }
}

</mosaic_0001>

<llo_original>
// kernel: tpu_custom_call.1
$region0: #{tpu_custom_call.1}
  #allocation0 [shape = 'u32[]', space=smem, size = 0x4, offset = 0x4, fixed_abs, tag = 'smem constant byte address 0x4 - core index']
  #allocation1 [shape = 'u32[144,128]{1,0:T(1,128)}', space=vmem, size = 0x12000, scoped, tag = 'internal scratch']
  %s0 = inlined_call_operand.hbm [shape: f32[8,128], index: 0, kind: input, shape index: {}]
  %s1 = inlined_call_operand.hbm [shape: f32[128,128], index: 1, kind: input, shape index: {}]
  %s2 = inlined_call_operand.vmem [shape: f32[1,128], index: 2, kind: input, shape index: {}]
  %s3 = inlined_call_operand.hbm [shape: f32[8,128], index: 3, kind: output, shape index: {}]
  %s4 = sld [smem:[#allocation0]]
  $region30: #{tpu_custom_call.1} parent=0
    _
  %s6 = ssub.s32 1, %s4
  %s7 = scalar_select 0, %s6, %s4
  $region1: #{tpu_custom_call.1} parent=0
    #allocation2 [shape = 'u8[4096]{0}', space=vmem, size = 0x1000, scoped, tag = 'input window, operand 0, single buffered']
    #allocation3 [shape = 's32[1]{0}', space=sflag, size = 0x4, scoped, tag = 'scoped memory for tpu_custom_call.1']
    #allocation4 [shape = 's32[1]{0}', space=sflag, size = 0x4, scoped, tag = 'scoped memory for tpu_custom_call.1']
    #allocation5 [shape = 'u8[65536]{0}', space=vmem, size = 0x10000, scoped, tag = 'input window, operand 1, single buffered']
    #allocation6 [shape = 's32[1]{0}', space=sflag, size = 0x4, scoped, tag = 'scoped memory for tpu_custom_call.1']
    #allocation7 [shape = 'u8[4096]{0}', space=vmem, size = 0x1000, scoped, tag = 'output window, operand 0, single buffered']
    %8 = vsyncpa [#allocation3], 0
    %9 = vsyncpa [#allocation6], 0
    %10 = vsyncpa [#allocation4], 0
    // Predicated region
    $region2: #{tpu_custom_call.1} parent=1 // pred_check
      _
    $region3: #{tpu_custom_call.1} parent=1 // pred_check_branch
      %12 = sbr.rel (0) target = $region5
    $region4: #{tpu_custom_call.1} parent=1 // pred_region
      %s14 = ssub.s32 128, 128
      %15 = vsyncadd [#allocation3], %s14
      %s17 = sshll.u32 [#allocation2], 4
      %s18 = int_to_ptr.vmem [resolvable:$true] %s17
      %20 = dma.hbm_to_vmem [thread:$0]  %s0, 128, %s18, [#allocation3]
    $region5: #{tpu_custom_call.1} parent=1 // pred_fallthru
      _
    // Predicated region
    $region6: #{tpu_custom_call.1} parent=1 // pred_check
      _
    $region7: #{tpu_custom_call.1} parent=1 // pred_check_branch
      %22 = sbr.rel (0) target = $region9
    $region8: #{tpu_custom_call.1} parent=1 // pred_region
      %s24 = ssub.s32 2048, 2048
      %25 = vsyncadd [#allocation6], %s24
      %s26 = sshll.u32 [#allocation5], 4
      %s27 = int_to_ptr.vmem [resolvable:$true] %s26
      %32 = dma.hbm_to_vmem [thread:$0]  %s1, 2048, %s27, [#allocation6], 128, 128, 8
    $region9: #{tpu_custom_call.1} parent=1 // pred_fallthru
      _
    // Predicated region
    $region10: #{tpu_custom_call.1} parent=1 // pred_check
      _
    $region11: #{tpu_custom_call.1} parent=1 // pred_check_branch
      %34 = sbr.rel (0) target = $region13
    $region12: #{tpu_custom_call.1} parent=1 // pred_region
      _
    $region13: #{tpu_custom_call.1} parent=1 // pred_fallthru
      _
    // Predicated region
    $region14: #{tpu_custom_call.1} parent=1 // pred_check
      _
    $region15: #{tpu_custom_call.1} parent=1 // pred_check_branch
      %36 = sbr.rel (0) target = $region17
    $region16: #{tpu_custom_call.1} parent=1 // pred_region
      %37 = dma.done [#allocation3], 128
    $region17: #{tpu_custom_call.1} parent=1 // pred_fallthru
      _
    // Predicated region
    $region18: #{tpu_custom_call.1} parent=1 // pred_check
      _
    $region19: #{tpu_custom_call.1} parent=1 // pred_check_branch
      %39 = sbr.rel (0) target = $region21
    $region20: #{tpu_custom_call.1} parent=1 // pred_region
      %40 = dma.done [#allocation6], 2048
    $region21: #{tpu_custom_call.1} parent=1 // pred_fallthru
      _
    %v41 = vld [vmem:[#allocation2] sm:$0xff]
    %v42 = vld [vmem:[#allocation5] sm:$0xff]
    %v43 = vld [vmem:[#allocation5 + $0x8] sm:$0xff]
    %v44 = vld [vmem:[#allocation5 + $0x10] sm:$0xff]
    %v45 = vld [vmem:[#allocation5 + $0x18] sm:$0xff]
    %v46 = vld [vmem:[#allocation5 + $0x20] sm:$0xff]
    %v47 = vld [vmem:[#allocation5 + $0x28] sm:$0xff]
    %v48 = vld [vmem:[#allocation5 + $0x30] sm:$0xff]
    %v49 = vld [vmem:[#allocation5 + $0x38] sm:$0xff]
    %v50 = vld [vmem:[#allocation5 + $0x40] sm:$0xff]
    %v51 = vld [vmem:[#allocation5 + $0x48] sm:$0xff]
    %v52 = vld [vmem:[#allocation5 + $0x50] sm:$0xff]
    %v53 = vld [vmem:[#allocation5 + $0x58] sm:$0xff]
    %v54 = vld [vmem:[#allocation5 + $0x60] sm:$0xff]
    %v55 = vld [vmem:[#allocation5 + $0x68] sm:$0xff]
    %v56 = vld [vmem:[#allocation5 + $0x70] sm:$0xff]
    %v57 = vld [vmem:[#allocation5 + $0x78] sm:$0xff]
    %v58 = vld [vmem:[%s2] sm:$0x1]
    %v60 = vlaneseq
    %v61 = vshrl.u32 %v60, 7
    %v62 = vsub.s32 0, %v61
    %v63 = vrot.slane %v58, %v62
    %65 = vmatprep.subr.mxu0 0.0
    %66 = vmatpush1.msra.mxu0 %v57
    %67 = vmatprep.subr.mxu0 0.0
    %68 = vmatpush1.msra.mxu0 %v56
    %69 = vmatprep.subr.mxu0 0.0
    %70 = vmatpush1.msra.mxu0 %v55
    %71 = vmatprep.subr.mxu0 0.0
    %72 = vmatpush1.msra.mxu0 %v54
    %73 = vmatprep.subr.mxu0 0.0
    %74 = vmatpush1.msra.mxu0 %v53
    %75 = vmatprep.subr.mxu0 0.0
    %76 = vmatpush1.msra.mxu0 %v52
    %77 = vmatprep.subr.mxu0 0.0
    %78 = vmatpush1.msra.mxu0 %v51
    %79 = vmatprep.subr.mxu0 0.0
    %80 = vmatpush1.msra.mxu0 %v50
    %81 = vmatprep.subr.mxu0 0.0
    %82 = vmatpush1.msra.mxu0 %v49
    %83 = vmatprep.subr.mxu0 0.0
    %84 = vmatpush1.msra.mxu0 %v48
    %85 = vmatprep.subr.mxu0 0.0
    %86 = vmatpush1.msra.mxu0 %v47
    %87 = vmatprep.subr.mxu0 0.0
    %88 = vmatpush1.msra.mxu0 %v46
    %89 = vmatprep.subr.mxu0 0.0
    %90 = vmatpush1.msra.mxu0 %v45
    %91 = vmatprep.subr.mxu0 0.0
    %92 = vmatpush1.msra.mxu0 %v44
    %93 = vmatprep.subr.mxu0 0.0
    %94 = vmatpush1.msra.mxu0 %v43
    %95 = vmatprep.subr.mxu0 0.0
    %96 = vmatpush1.msra.mxu0 %v42
    %97 = vmatprep.subr.mxu0 0.0
    %98 = vmatpush2.msra.mxu0 0.0
    %99 = vmatprep.subr.mxu0 0.0
    %100 = vmatpush2.msra.mxu0 0.0
    %101 = vmatprep.subr.mxu0 0.0
    %102 = vmatpush2.msra.mxu0 0.0
    %103 = vmatprep.subr.mxu0 0.0
    %104 = vmatpush2.msra.mxu0 0.0
    %105 = vmatprep.subr.mxu0 0.0
    %106 = vmatpush2.msra.mxu0 0.0
    %107 = vmatprep.subr.mxu0 0.0
    %108 = vmatpush2.msra.mxu0 0.0
    %109 = vmatprep.subr.mxu0 0.0
    %110 = vmatpush2.msra.mxu0 0.0
    %111 = vmatprep.subr.mxu0 0.0
    %112 = vmatpush2.msra.mxu0 0.0
    %113 = vmatprep.subr.mxu0 0.0
    %114 = vmatpush2.msra.mxu0 0.0
    %115 = vmatprep.subr.mxu0 0.0
    %116 = vmatpush2.msra.mxu0 0.0
    %117 = vmatprep.subr.mxu0 0.0
    %118 = vmatpush2.msra.mxu0 0.0
    %119 = vmatprep.subr.mxu0 0.0
    %120 = vmatpush2.msra.mxu0 0.0
    %121 = vmatprep.subr.mxu0 0.0
    %122 = vmatpush2.msra.mxu0 0.0
    %123 = vmatprep.subr.mxu0 0.0
    %124 = vmatpush2.msra.mxu0 0.0
    %125 = vmatprep.subr.mxu0 0.0
    %126 = vmatpush2.msra.mxu0 0.0
    %127 = vmatprep.subr.mxu0 0.0
    %128 = vmatpush2.msra.mxu0 0.0
    %129 = vmatprep.mubr.f32.mxu0 0.0
    %130 = vmatmul.mubr.f32.gmra.mxu0 %v41
    %v131 = vpop.f32.mrf.mxu0
    %v132 = vadd.f32 %v63, %v131
    %v133 = vpop.f32.mrf.mxu0
    %134 = vdwg.mxu0
    %135 = vst [vmem:[#allocation7] sm:$0xff] %v132
    // Predicated region
    $region22: #{tpu_custom_call.1} parent=1 // pred_check
      _
    $region23: #{tpu_custom_call.1} parent=1 // pred_check_branch
      %137 = sbr.rel (0) target = $region25
    $region24: #{tpu_custom_call.1} parent=1 // pred_region
      %s139 = ssub.s32 128, 128
      %140 = vsyncadd [#allocation4], %s139
      %s142 = sshll.u32 [#allocation7], 4
      %s143 = int_to_ptr.vmem [resolvable:$true] %s142
      %145 = dma.vmem_to_hbm [thread:$0]  %s143, 128, %s3, [#allocation4]
    $region25: #{tpu_custom_call.1} parent=1 // pred_fallthru
      _
    // Predicated region
    $region26: #{tpu_custom_call.1} parent=1 // pred_check
      _
    $region27: #{tpu_custom_call.1} parent=1 // pred_check_branch
      %147 = sbr.rel (0) target = $region29
    $region28: #{tpu_custom_call.1} parent=1 // pred_region
      %148 = dma.done [#allocation4], 128
    $region29: #{tpu_custom_call.1} parent=1 // pred_fallthru
      _
    %149 = vsyncpa [#allocation3], 1
    %150 = vsyncpa [#allocation6], 1
    %151 = vsyncpa [#allocation4], 1

</llo_original>
